<compile_context>
chip_gen: v6e
topology: v6e:2x2x1
jax: 0.10.0
libtpu: 0.0.40
codegen_flags: <defaults>
</compile_context>

<pallas_src>
import functools

import jax
import jax.numpy as jnp
from jax.experimental import pallas as pl
from jax.experimental.pallas import tpu as pltpu


def _cln_kernel(x_ref, g_ref, b_ref, o_ref, *, eps, inv_c, unroll_c):
    # x_ref/o_ref: (C, tile_hw); g_ref/b_ref: (C, 1), already float32.
    x = x_ref[...].astype(jnp.float32)
    c = x.shape[0]

    if unroll_c:
        # Tiny C: unrolled VALU sums, no XLU reductions at all.
        s = x[0]
        for i in range(1, c):
            s = s + x[i]
        mean = (s * inv_c)[None, :]                 # (1, tile_hw)
        centered = x - mean                         # (C, tile_hw)
        sq = centered[0] * centered[0]
        for i in range(1, c):
            sq = sq + centered[i] * centered[i]
        var = (sq * inv_c)[None, :]                 # (1, tile_hw)
    else:
        mean = jnp.sum(x, axis=0, keepdims=True) * inv_c
        centered = x - mean
        var = jnp.sum(centered * centered, axis=0, keepdims=True) * inv_c

    inv_std = jax.lax.rsqrt(var + eps)
    y = centered * inv_std * g_ref[...] + b_ref[...]
    o_ref[...] = y.astype(o_ref.dtype)


def channel_layer_norm(x, gamma, beta, *, eps=1e-5, target_block_bytes=2 << 20):
    """x: (N, C, H, W). gamma, beta: (C,). Returns (N, C, H, W).

    Equivalent to: permute NCHW->NHWC, LayerNorm(C), permute back.
    """
    N, C, H, W = x.shape
    HW = H * W

    # Free views -- no transposes, no extra HBM traffic.
    x3d = x.reshape(N, C, HW)
    g2d = gamma.astype(jnp.float32).reshape(C, 1)
    b2d = beta.astype(jnp.float32).reshape(C, 1)

    # Pick the lane-tile: largest multiple of 128 keeping one (C, tile_hw)
    # buffer around target_block_bytes (conservative for v7x's smaller VMEM;
    # plenty big enough to amortize the ~0.35us per-grid-step overhead).
    itemsize = jnp.dtype(x.dtype).itemsize
    max_lanes = max(128, (target_block_bytes // max(1, C * itemsize)) // 128 * 128)
    tile_hw = HW if HW <= max_lanes else max_lanes

    grid = (N, pl.cdiv(HW, tile_hw))

    kernel = functools.partial(
        _cln_kernel, eps=float(eps), inv_c=1.0 / float(C), unroll_c=(C <= 8))

    out3d = pl.pallas_call(
        kernel,
        out_shape=jax.ShapeDtypeStruct((N, C, HW), x.dtype),
        grid_spec=pltpu.PrefetchScalarGridSpec(
            num_scalar_prefetch=0,
            grid=grid,
            in_specs=[
                pl.BlockSpec((pl.Squeezed(), C, tile_hw),
                             lambda n, j: (n, 0, j)),
                pl.BlockSpec((C, 1), lambda n, j: (0, 0)),   # stays VMEM-resident
                pl.BlockSpec((C, 1), lambda n, j: (0, 0)),
            ],
            out_specs=pl.BlockSpec((pl.Squeezed(), C, tile_hw),
                                   lambda n, j: (n, 0, j)),
        ),
        compiler_params=pltpu.CompilerParams(
            dimension_semantics=("parallel", "parallel")),
    )(x3d, g2d, b2d)

    return out3d.reshape(N, C, H, W)


def _reference(x, gamma, beta, eps=1e-5):
    xt = jnp.transpose(x, (0, 2, 3, 1)).astype(jnp.float32)
    mean = jnp.mean(xt, axis=-1, keepdims=True)
    var = jnp.mean((xt - mean) ** 2, axis=-1, keepdims=True)
    y = (xt - mean) / jnp.sqrt(var + eps) * gamma + beta
    return jnp.transpose(y, (0, 3, 1, 2)).astype(x.dtype)


if __name__ == "__main__":
    key = jax.random.PRNGKey(0)
    kx, kg, kb = jax.random.split(key, 3)

    N, C, H, W = 2, 4, 16, 16
    x = jax.random.normal(kx, (N, C, H, W), dtype=jnp.float32)
    # PyTorch default init is gamma=1, beta=0; random values make the check stricter.
    gamma = 1.0 + 0.1 * jax.random.normal(kg, (C,), dtype=jnp.float32)
    beta = 0.1 * jax.random.normal(kb, (C,), dtype=jnp.float32)

    out = channel_layer_norm(x, gamma, beta)
    out = jax.block_until_ready(out)

    ref = _reference(x, gamma, beta)
    assert out.shape == (N, C, H, W)
    assert jnp.allclose(out, ref, atol=1e-5, rtol=1e-5)

    # TODO(synk): full SRTransformer (convs, PixelShuffle, MDTA, GDFN) is left
    # to XLA; only ChannelLayerNorm is implemented as a Pallas kernel here.
    print("KERNEL_OK")
</pallas_src>

<mosaic_0001>
module attributes {stable_mosaic.version = 11 : i64} {
  func.func @_cln_kernel(%arg0: i32, %arg1: i32, %arg2: memref<1x4x256xf32, #tpu.memory_space<vmem>>, %arg3: memref<4x1xf32, #tpu.memory_space<vmem>>, %arg4: memref<4x1xf32, #tpu.memory_space<vmem>>, %arg5: memref<1x4x256xf32, #tpu.memory_space<vmem>>) attributes {dimension_semantics = [#tpu.dimension_semantics<parallel>, #tpu.dimension_semantics<parallel>], iteration_bounds = array<i64: 2, 1>, scalar_prefetch = 0 : i64, scratch_operands = 0 : i64, tpu.core_type = #tpu.core_type<tc>, window_params = [{transform_indices = @transform_0, window_bounds = array<i64: 1, 4, 256>}, {pipeline_mode = #tpu.pipeline_mode<synchronous>, transform_indices = @transform_1, window_bounds = array<i64: 4, 1>}, {pipeline_mode = #tpu.pipeline_mode<synchronous>, transform_indices = @transform_2, window_bounds = array<i64: 4, 1>}, {transform_indices = @transform_3, window_bounds = array<i64: 1, 4, 256>}]} {
    %c0 = arith.constant 0 : index
    %c0_0 = arith.constant 0 : index
    %c0_1 = arith.constant 0 : index
    %0 = vector.load %arg2[%c0, %c0_0, %c0_1] : memref<1x4x256xf32, #tpu.memory_space<vmem>>, vector<1x4x256xf32>
    %1 = vector.shape_cast %0 : vector<1x4x256xf32> to vector<4x256xf32>
    %2 = vector.extract_strided_slice %1 {offsets = [0, 0], sizes = [1, 256], strides = [1, 1]} : vector<4x256xf32> to vector<1x256xf32>
    %3 = vector.shape_cast %2 : vector<1x256xf32> to vector<256xf32>
    %4 = vector.extract_strided_slice %1 {offsets = [1, 0], sizes = [1, 256], strides = [1, 1]} : vector<4x256xf32> to vector<1x256xf32>
    %5 = vector.shape_cast %4 : vector<1x256xf32> to vector<256xf32>
    %6 = arith.addf %3, %5 : vector<256xf32>
    %7 = vector.extract_strided_slice %1 {offsets = [2, 0], sizes = [1, 256], strides = [1, 1]} : vector<4x256xf32> to vector<1x256xf32>
    %8 = vector.shape_cast %7 : vector<1x256xf32> to vector<256xf32>
    %9 = arith.addf %6, %8 : vector<256xf32>
    %10 = vector.extract_strided_slice %1 {offsets = [3, 0], sizes = [1, 256], strides = [1, 1]} : vector<4x256xf32> to vector<1x256xf32>
    %11 = vector.shape_cast %10 : vector<1x256xf32> to vector<256xf32>
    %12 = arith.addf %9, %11 : vector<256xf32>
    %cst = arith.constant 2.500000e-01 : f32
    %13 = vector.broadcast %cst : f32 to vector<256xf32>
    %14 = arith.mulf %12, %13 : vector<256xf32>
    %15 = vector.shape_cast %14 : vector<256xf32> to vector<1x256xf32>
    %16 = vector.broadcast %15 : vector<1x256xf32> to vector<4x256xf32>
    %17 = arith.subf %1, %16 : vector<4x256xf32>
    %18 = vector.extract_strided_slice %17 {offsets = [0, 0], sizes = [1, 256], strides = [1, 1]} : vector<4x256xf32> to vector<1x256xf32>
    %19 = vector.shape_cast %18 : vector<1x256xf32> to vector<256xf32>
    %20 = vector.extract_strided_slice %17 {offsets = [0, 0], sizes = [1, 256], strides = [1, 1]} : vector<4x256xf32> to vector<1x256xf32>
    %21 = vector.shape_cast %20 : vector<1x256xf32> to vector<256xf32>
    %22 = arith.mulf %19, %21 : vector<256xf32>
    %23 = vector.extract_strided_slice %17 {offsets = [1, 0], sizes = [1, 256], strides = [1, 1]} : vector<4x256xf32> to vector<1x256xf32>
    %24 = vector.shape_cast %23 : vector<1x256xf32> to vector<256xf32>
    %25 = vector.extract_strided_slice %17 {offsets = [1, 0], sizes = [1, 256], strides = [1, 1]} : vector<4x256xf32> to vector<1x256xf32>
    %26 = vector.shape_cast %25 : vector<1x256xf32> to vector<256xf32>
    %27 = arith.mulf %24, %26 : vector<256xf32>
    %28 = arith.addf %22, %27 : vector<256xf32>
    %29 = vector.extract_strided_slice %17 {offsets = [2, 0], sizes = [1, 256], strides = [1, 1]} : vector<4x256xf32> to vector<1x256xf32>
    %30 = vector.shape_cast %29 : vector<1x256xf32> to vector<256xf32>
    %31 = vector.extract_strided_slice %17 {offsets = [2, 0], sizes = [1, 256], strides = [1, 1]} : vector<4x256xf32> to vector<1x256xf32>
    %32 = vector.shape_cast %31 : vector<1x256xf32> to vector<256xf32>
    %33 = arith.mulf %30, %32 : vector<256xf32>
    %34 = arith.addf %28, %33 : vector<256xf32>
    %35 = vector.extract_strided_slice %17 {offsets = [3, 0], sizes = [1, 256], strides = [1, 1]} : vector<4x256xf32> to vector<1x256xf32>
    %36 = vector.shape_cast %35 : vector<1x256xf32> to vector<256xf32>
    %37 = vector.extract_strided_slice %17 {offsets = [3, 0], sizes = [1, 256], strides = [1, 1]} : vector<4x256xf32> to vector<1x256xf32>
    %38 = vector.shape_cast %37 : vector<1x256xf32> to vector<256xf32>
    %39 = arith.mulf %36, %38 : vector<256xf32>
    %40 = arith.addf %34, %39 : vector<256xf32>
    %cst_2 = arith.constant 2.500000e-01 : f32
    %41 = vector.broadcast %cst_2 : f32 to vector<256xf32>
    %42 = arith.mulf %40, %41 : vector<256xf32>
    %43 = vector.shape_cast %42 : vector<256xf32> to vector<1x256xf32>
    %cst_3 = arith.constant 9.99999974E-6 : f32
    %44 = vector.broadcast %cst_3 : f32 to vector<1x256xf32>
    %45 = arith.addf %43, %44 : vector<1x256xf32>
    %46 = math.rsqrt %45 : vector<1x256xf32>
    %47 = vector.broadcast %46 : vector<1x256xf32> to vector<4x256xf32>
    %48 = arith.mulf %17, %47 : vector<4x256xf32>
    %c0_4 = arith.constant 0 : index
    %c0_5 = arith.constant 0 : index
    %49 = vector.load %arg3[%c0_4, %c0_5] : memref<4x1xf32, #tpu.memory_space<vmem>>, vector<4x1xf32>
    %50 = vector.broadcast %49 : vector<4x1xf32> to vector<4x256xf32>
    %51 = arith.mulf %48, %50 : vector<4x256xf32>
    %c0_6 = arith.constant 0 : index
    %c0_7 = arith.constant 0 : index
    %52 = vector.load %arg4[%c0_6, %c0_7] : memref<4x1xf32, #tpu.memory_space<vmem>>, vector<4x1xf32>
    %53 = vector.broadcast %52 : vector<4x1xf32> to vector<4x256xf32>
    %54 = arith.addf %51, %53 : vector<4x256xf32>
    %c0_8 = arith.constant 0 : index
    %c0_9 = arith.constant 0 : index
    %c0_10 = arith.constant 0 : index
    %55 = vector.load %arg5[%c0_8, %c0_9, %c0_10] : memref<1x4x256xf32, #tpu.memory_space<vmem>>, vector<1x4x256xf32>
    %56 = vector.shape_cast %55 : vector<1x4x256xf32> to vector<4x256xf32>
    %57 = vector.shape_cast %54 : vector<4x256xf32> to vector<1x4x256xf32>
    tpu.vector_store %arg5[%c0_8, %c0_9, %c0_10], %57 {strides = array<i32>} : memref<1x4x256xf32, #tpu.memory_space<vmem>>, vector<1x4x256xf32>,
    return
  }
  func.func @transform_0(%arg0: i32, %arg1: i32) -> (i32, i32, i32) {
    %c0_i32 = arith.constant 0 : i32
    %c0_i32_0 = arith.constant 0 : i32
    return %arg0, %c0_i32, %arg1 : i32, i32, i32
  }
  func.func @transform_1(%arg0: i32, %arg1: i32) -> (i32, i32) {
    %c0_i32 = arith.constant 0 : i32
    %c0_i32_0 = arith.constant 0 : i32
    %c0_i32_1 = arith.constant 0 : i32
    return %c0_i32, %c0_i32_0 : i32, i32
  }
  func.func @transform_2(%arg0: i32, %arg1: i32) -> (i32, i32) {
    %c0_i32 = arith.constant 0 : i32
    %c0_i32_0 = arith.constant 0 : i32
    %c0_i32_1 = arith.constant 0 : i32
    return %c0_i32, %c0_i32_0 : i32, i32
  }
  func.func @transform_3(%arg0: i32, %arg1: i32) -> (i32, i32, i32) {
    %c0_i32 = arith.constant 0 : i32
    %c0_i32_0 = arith.constant 0 : i32
    return %arg0, %c0_i32, %arg1 : i32, i32, i32
  }
}

</mosaic_0001>

<llo_original>
// kernel: tpu_custom_call.1
$region0: #{tpu_custom_call.1}
  #allocation0 [shape = 'u32[]', space=smem, size = 0x4, offset = 0x4, fixed_abs, tag = 'smem constant byte address 0x4 - core index']
  #allocation1 [shape = 'u32[144,128]{1,0:T(1,128)}', space=vmem, size = 0x12000, scoped, tag = 'internal scratch']
  %s0 = inlined_call_operand.hbm [shape: f32[2,4,256], index: 0, kind: input, shape index: {}]
  %s1 = inlined_call_operand.vmem [shape: f32[4,1], index: 1, kind: input, shape index: {}]
  %s2 = inlined_call_operand.vmem [shape: f32[4,1], index: 2, kind: input, shape index: {}]
  %s3 = inlined_call_operand.hbm [shape: f32[2,4,256], index: 3, kind: output, shape index: {}]
  %s4 = sld [smem:[#allocation0]]
  $region49: #{tpu_custom_call.1} parent=0
    _
  %s6 = ssub.s32 1, %s4
  %s7 = scalar_select 0, %s6, %s4
  $region1: #{tpu_custom_call.1} parent=0
    #allocation2 [shape = 'u8[8192]{0}', space=vmem, size = 0x2000, scoped, tag = 'input window, operand 0']
    #allocation3 [shape = 's32[2]{0}', space=sflag, size = 0x8, scoped, tag = 'scoped memory for tpu_custom_call.1']
    #allocation4 [shape = 's32[2]{0}', space=sflag, size = 0x8, scoped, tag = 'scoped memory for tpu_custom_call.1']
    #allocation5 [shape = 'u8[8192]{0}', space=vmem, size = 0x2000, scoped, tag = 'output window, operand 0']
    %8 = vsyncpa [#allocation3], 0
    %s9 = scalar_lea.sflag [#allocation3], 1
    %10 = vsyncpa %s9, 0
    %11 = vsyncpa [#allocation4], 0
    %s12 = scalar_lea.sflag [#allocation4], 1
    %13 = vsyncpa %s12, 0
    loop: start=0, step=1, limit=4
    $region2: #{tpu_custom_call.1} parent=1 // loop_pre_header
      _
    $region3: #{tpu_custom_call.1} parent=1 // loop_header
      %s15 = sphi 0, %s19
      %p16 = scmp.ge.s32.totalorder %s15, 4
      %s22 = sphi 0, %s34
      %s23 = sphi 0, %s30
      %s24 = sphi 0, %s22
      %s25 = sphi 0, %s23
      %s26 = sphi 0, %s24
      %s27 = sphi 0, %s25
      %s39 = sphi 0, %s41
      %s42 = sphi 0, %s39
      %s43 = sphi 0, %s42
      %s59 = sphi 0, %s43
      %s63 = sphi 0, %s63
      %s65 = sphi 0, %s63
      %s66 = sphi 0, %s65
      %s80 = sphi 0, %s66
      %s84 = sphi 0, %s84
      %s86 = sphi 0, %s84
      %s87 = sphi 0, %s86
      %s101 = sphi 0, %s87
      %s109 = sphi 0, %s111
      %s112 = sphi 0, %s109
      %s113 = sphi 0, %s112
      %s129 = sphi 0, %s113
    $region4: #{tpu_custom_call.1} parent=1 // loop_header_branch
      %18 = sbr.rel (%p16) target = $region8
    $region5: #{tpu_custom_call.1} parent=1 // loop_body
      %s20 = ssub.s32 %s15, 1
      %s21 = ssub.s32 %s15, 2
      %s28 = sadd.s32 1, %s23
      %p29 = scmp.ge.s32.totalorder %s28, 1
      %s30 = scalar_select %p29, 0, %s28
      %s31 = sadd.s32 1, %s22
      %s32 = scalar_select %p29, %s31, %s22
      %p33 = scmp.ge.s32.totalorder %s32, 2
      %s34 = scalar_select %p33, 0, %s32
      %s35 = ssub.s32 %s22, %s34
      %s36 = ssub.s32 %s23, %s30
      %s37 = sor.u32 %s35, %s36
      %p38 = scmp.eq.s32.totalorder %s37, 0
      %s40 = sadd.s32 %s39, 1
      %s41 = scalar_select %p38, %s39, %s40
      %p44 = pneg %p38
      %p45 = scmp.eq.s32.totalorder %s15, 1
      %p46 = por %p44, %p45
      %p47 = scmp.ne.s32.totalorder %s39, %s42
      %p48 = scmp.eq.s32.totalorder %s15, 0
      %p49 = por %p47, %p48
      %p50 = scmp.ne.s32.totalorder %s39, %s42
      %p51 = scmp.eq.s32.totalorder %s20, 1
      %p52 = por %p50, %p51
      %p53 = scmp.ne.s32.totalorder %s42, %s43
      %p54 = scmp.eq.s32.totalorder %s20, 0
      %p55 = por %p53, %p54
      %p56 = scmp.ne.s32.totalorder %s42, %s43
      %p57 = scmp.eq.s32.totalorder %s21, 1
      %p58 = por %p56, %p57
      %p60 = scmp.ne.s32.totalorder %s43, %s59
      %p61 = scmp.eq.s32.totalorder %s21, 0
      %p62 = por %p60, %p61
      %s64 = sadd.s32 %s63, 1
      %p67 = scmp.eq.s32.totalorder %s15, 1
      %p68 = scmp.ne.s32.totalorder %s63, %s65
      %p69 = scmp.eq.s32.totalorder %s15, 0
      %p70 = por %p68, %p69
      %p71 = scmp.ne.s32.totalorder %s63, %s65
      %p72 = scmp.eq.s32.totalorder %s20, 1
      %p73 = por %p71, %p72
      %p74 = scmp.ne.s32.totalorder %s65, %s66
      %p75 = scmp.eq.s32.totalorder %s20, 0
      %p76 = por %p74, %p75
      %p77 = scmp.ne.s32.totalorder %s65, %s66
      %p78 = scmp.eq.s32.totalorder %s21, 1
      %p79 = por %p77, %p78
      %p81 = scmp.ne.s32.totalorder %s66, %s80
      %p82 = scmp.eq.s32.totalorder %s21, 0
      %p83 = por %p81, %p82
      %s85 = sadd.s32 %s84, 1
      %p88 = scmp.eq.s32.totalorder %s15, 1
      %p89 = scmp.ne.s32.totalorder %s84, %s86
      %p90 = scmp.eq.s32.totalorder %s15, 0
      %p91 = por %p89, %p90
      %p92 = scmp.ne.s32.totalorder %s84, %s86
      %p93 = scmp.eq.s32.totalorder %s20, 1
      %p94 = por %p92, %p93
      %p95 = scmp.ne.s32.totalorder %s86, %s87
      %p96 = scmp.eq.s32.totalorder %s20, 0
      %p97 = por %p95, %p96
      %p98 = scmp.ne.s32.totalorder %s86, %s87
      %p99 = scmp.eq.s32.totalorder %s21, 1
      %p100 = por %p98, %p99
      %p102 = scmp.ne.s32.totalorder %s87, %s101
      %p103 = scmp.eq.s32.totalorder %s21, 0
      %p104 = por %p102, %p103
      %s105 = ssub.s32 %s22, %s34
      %s106 = ssub.s32 %s23, %s30
      %s107 = sor.u32 %s105, %s106
      %p108 = scmp.eq.s32.totalorder %s107, 0
      %s110 = sadd.s32 %s109, 1
      %s111 = scalar_select %p108, %s109, %s110
      %p114 = pneg %p108
      %p115 = scmp.eq.s32.totalorder %s15, 1
      %p116 = por %p114, %p115
      %p117 = scmp.ne.s32.totalorder %s109, %s112
      %p118 = scmp.eq.s32.totalorder %s15, 0
      %p119 = por %p117, %p118
      %p120 = scmp.ne.s32.totalorder %s109, %s112
      %p121 = scmp.eq.s32.totalorder %s20, 1
      %p122 = por %p120, %p121
      %p123 = scmp.ne.s32.totalorder %s112, %s113
      %p124 = scmp.eq.s32.totalorder %s20, 0
      %p125 = por %p123, %p124
      %p126 = scmp.ne.s32.totalorder %s112, %s113
      %p127 = scmp.eq.s32.totalorder %s21, 1
      %p128 = por %p126, %p127
      %p130 = scmp.ne.s32.totalorder %s113, %s129
      %p131 = scmp.eq.s32.totalorder %s21, 0
      %p132 = por %p130, %p131
      %p133 = scmp.le.s32.totalorder 1, %s15
      %p134 = scmp.lt.s32.totalorder %s15, 3
      %p135 = pnand %p133, %p134
      %p136 = pneg %p135
      // Predicated region
      $region9: #{tpu_custom_call.1} parent=5 // pred_check
        _
      $region10: #{tpu_custom_call.1} parent=5 // pred_check_branch
        %138 = sbr.rel (%p135) target = $region12
      $region11: #{tpu_custom_call.1} parent=5 // pred_region
        %s139 = ssub.s32 %s15, 1
        // Predicated region
        $region13: #{tpu_custom_call.1} parent=11 // pred_check
          %p140 = pneg %p76
        $region14: #{tpu_custom_call.1} parent=11 // pred_check_branch
          %142 = sbr.rel (%p140) target = $region16
        $region15: #{tpu_custom_call.1} parent=11 // pred_region
          _
        $region16: #{tpu_custom_call.1} parent=11 // pred_fallthru
          _
        // Predicated region
        $region17: #{tpu_custom_call.1} parent=11 // pred_check
          %p143 = pneg %p97
        $region18: #{tpu_custom_call.1} parent=11 // pred_check_branch
          %145 = sbr.rel (%p143) target = $region20
        $region19: #{tpu_custom_call.1} parent=11 // pred_region
          _
        $region20: #{tpu_custom_call.1} parent=11 // pred_fallthru
          _
      $region12: #{tpu_custom_call.1} parent=5 // pred_fallthru
        _
      %p146 = scmp.lt.s32.totalorder %s15, 2
      // Predicated region
      $region21: #{tpu_custom_call.1} parent=5 // pred_check
        %p147 = pneg %p146
      $region22: #{tpu_custom_call.1} parent=5 // pred_check_branch
        %149 = sbr.rel (%p147) target = $region24
      $region23: #{tpu_custom_call.1} parent=5 // pred_region
        // Predicated region
        $region25: #{tpu_custom_call.1} parent=23 // pred_check
          %p150 = pneg %p49
        $region26: #{tpu_custom_call.1} parent=23 // pred_check_branch
          %152 = sbr.rel (%p150) target = $region28
        $region27: #{tpu_custom_call.1} parent=23 // pred_region
          %s153 = sand.u32 %s39, 1
          %s154 = scalar_lea.sflag [#allocation3], %s153
          %s155 = sand.u32 %s39, 1
          %s156 = smul.addr %s155, 8
          %s157 = scalar_lea.vmem [#allocation2], %s156
          %s158 = smul.u32 2, %s23
          %s160 = ssub.s32 128, 128
          %161 = vsyncadd %s154, %s160
          %s162 = smul.addr %s22, 2
          %s163 = sadd.s32 %s158, %s162
          %s164 = smul.addr %s163, 64
          %s165 = scalar_lea.hbm %s0, %s164
          %s167 = sshll.u32 %s157, 4
          %s168 = int_to_ptr.vmem [resolvable:$true] %s167
          %170 = dma.hbm_to_vmem [thread:$0]  %s165, 128, %s168, %s154
        $region28: #{tpu_custom_call.1} parent=23 // pred_fallthru
          _
      $region24: #{tpu_custom_call.1} parent=5 // pred_fallthru
        _
      %p171 = scmp.le.s32.totalorder 1, %s15
      %p172 = scmp.lt.s32.totalorder %s15, 3
      %p173 = pnand %p171, %p172
      %p174 = pneg %p173
      // Predicated region
      $region29: #{tpu_custom_call.1} parent=5 // pred_check
        _
      $region30: #{tpu_custom_call.1} parent=5 // pred_check_branch
        %176 = sbr.rel (%p173) target = $region32
      $region31: #{tpu_custom_call.1} parent=5 // pred_region
        %s177 = ssub.s32 %s15, 1
        %s178 = sand.u32 %s42, 1
        %s179 = scalar_lea.sflag [#allocation3], %s178
        %s180 = sand.u32 %s42, 1
        %s181 = smul.addr %s180, 8
        %s182 = scalar_lea.vmem [#allocation2], %s181
        // Predicated region
        $region33: #{tpu_custom_call.1} parent=31 // pred_check
          %p183 = pneg %p55
        $region34: #{tpu_custom_call.1} parent=31 // pred_check_branch
          %185 = sbr.rel (%p183) target = $region36
        $region35: #{tpu_custom_call.1} parent=31 // pred_region
          %186 = dma.done %s179, 128
        $region36: #{tpu_custom_call.1} parent=31 // pred_fallthru
          _
        %s187 = sand.u32 %s42, 1
        %s188 = scalar_lea.sflag [#allocation3], %s187
        %s189 = sand.u32 %s42, 1
        %s190 = smul.addr %s189, 8
        %s191 = scalar_lea.vmem [#allocation2], %s190
        %p192 = pneg %p55
        %p193 = pneg %p52
        %p194 = pneg %p76
        %p195 = pneg %p73
        %p196 = pneg %p97
        %p197 = pneg %p94
        %p198 = pneg %p125
        %p199 = pneg %p122
        %s200 = sand.u32 %s112, 1
        %s201 = scalar_lea.sflag [#allocation4], %s200
        %s202 = sand.u32 %s112, 1
        %s203 = smul.addr %s202, 8
        %s204 = scalar_lea.vmem [#allocation5], %s203
        %s205 = smul.u32 2, %s25
        %s206 = smul.u32 2, %s25
        %v207 = vld [vmem:[%s182] sm:$0xff]
        %v209 = vrot.slane %v207, 5
        %v210 = vrot.slane %v209, 4
        %v212 = vadd.f32 %v207, %v210
        %v213 = vrot.slane %v207, 6
        %v214 = vrot.slane %v213, 4
        %v216 = vadd.f32 %v212, %v214
        %v217 = vrot.slane %v207, 7
        %v218 = vrot.slane %v217, 4
        %v220 = vadd.f32 %v216, %v218
        %v221 = vmul.f32 %v220, 0.25
        %v223 = vlaneseq
        %v224 = vshrl.u32 %v223, 7
        %v225 = vsub.s32 0, %v224
        %v226 = vrot.slane %v221, %v225
        %v227 = vlaneseq
        %v228 = vshrl.u32 %v227, 7
        %v229 = vsub.s32 4, %v228
        %v230 = vrot.slane %v221, %v229
        %v233 = vlaneseq
        %v234 = vshrl.u32 %v233, 7
        %v235 = vsub.s32 0, %v234
        %v236 = vrot.slane %v226, %v235
        %v237 = vlaneseq
        %v238 = vshrl.u32 %v237, 7
        %v239 = vsub.s32 0, %v238
        %v240 = vrot.slane %v230, %v239
        %v243 = vcombine.low %v236, %v240
        %v245 = vsub.f32 %v207, %v243
        %v246 = vmul.f32 %v245, %v245
        %v248 = vrot.slane %v246, 5
        %v249 = vrot.slane %v248, 4
        %v251 = vadd.f32 %v246, %v249
        %v252 = vrot.slane %v246, 6
        %v253 = vrot.slane %v252, 4
        %v255 = vadd.f32 %v251, %v253
        %v256 = vrot.slane %v246, 7
        %v257 = vrot.slane %v256, 4
        %v259 = vadd.f32 %v255, %v257
        %v260 = vmul.f32 %v259, 0.25
        %v261 = vadd.f32 %v260, 1e-05
        %v262 = vrsqrt.pop %v261
        %v264 = vlaneseq
        %v265 = vshrl.u32 %v264, 7
        %v266 = vsub.s32 0, %v265
        %v267 = vrot.slane %v262, %v266
        %v268 = vlaneseq
        %v269 = vshrl.u32 %v268, 7
        %v270 = vsub.s32 4, %v269
        %v271 = vrot.slane %v262, %v270
        %v274 = vlaneseq
        %v275 = vshrl.u32 %v274, 7
        %v276 = vsub.s32 0, %v275
        %v277 = vrot.slane %v267, %v276
        %v278 = vlaneseq
        %v279 = vshrl.u32 %v278, 7
        %v280 = vsub.s32 0, %v279
        %v281 = vrot.slane %v271, %v280
        %v284 = vcombine.low %v277, %v281
        %v286 = vmul.f32 %v245, %v284
        %v287 = vld [vmem:[%s1] sm:$0xf]
        %289 = vset.pattern.permute.xlu0 0
        %290 = vperm.xlu0 %289, %v287
        %v291 = vpop.permute.xlu0 %290
        %v293 = vunpack.c.l.s4 839922192
        %v294 = vunpack.c.0.s8 %v293
        %v295 = vlaneseq
        %v296 = vshrl.u32 %v295, 7
        %v297 = vsub.s32 %v294, %v296
        %v298 = vrot.slane %v291, %v297
        %v300 = vmul.f32 %v286, %v298
        %v301 = vld [vmem:[%s2] sm:$0xf]
        %303 = vset.pattern.permute.xlu0 0
        %304 = vperm.xlu0 %303, %v301
        %v305 = vpop.permute.xlu0 %304
        %v307 = vunpack.c.l.s4 839922192
        %v308 = vunpack.c.0.s8 %v307
        %v309 = vlaneseq
        %v310 = vshrl.u32 %v309, 7
        %v311 = vsub.s32 %v308, %v310
        %v312 = vrot.slane %v305, %v311
        %v314 = vadd.f32 %v300, %v312
        %315 = vst [vmem:[%s204] sm:$0xff] %v314
        %s316 = sand.u32 %s112, 1
        %s317 = scalar_lea.sflag [#allocation4], %s316
        %s318 = sand.u32 %s112, 1
        %s319 = smul.addr %s318, 8
        %s320 = scalar_lea.vmem [#allocation5], %s319
        // Predicated region
        $region37: #{tpu_custom_call.1} parent=31 // pred_check
          %p321 = pneg %p122
        $region38: #{tpu_custom_call.1} parent=31 // pred_check_branch
          %323 = sbr.rel (%p321) target = $region40
        $region39: #{tpu_custom_call.1} parent=31 // pred_region
          %s324 = smul.u32 2, %s25
          %s326 = ssub.s32 128, 128
          %327 = vsyncadd %s317, %s326
          %s328 = smul.addr %s24, 2
          %s329 = sadd.s32 %s324, %s328
          %s330 = smul.addr %s329, 64
          %s331 = scalar_lea.hbm %s3, %s330
          %s333 = sshll.u32 %s320, 4
          %s334 = int_to_ptr.vmem [resolvable:$true] %s333
          %336 = dma.vmem_to_hbm [thread:$0]  %s334, 128, %s331, %s317
        $region40: #{tpu_custom_call.1} parent=31 // pred_fallthru
          _
      $region32: #{tpu_custom_call.1} parent=5 // pred_fallthru
        _
      %p337 = scmp.le.s32.totalorder 2, %s15
      // Predicated region
      $region41: #{tpu_custom_call.1} parent=5 // pred_check
        %p338 = pneg %p337
      $region42: #{tpu_custom_call.1} parent=5 // pred_check_branch
        %340 = sbr.rel (%p338) target = $region44
      $region43: #{tpu_custom_call.1} parent=5 // pred_region
        %s341 = ssub.s32 %s15, 2
        // Predicated region
        $region45: #{tpu_custom_call.1} parent=43 // pred_check
          %p342 = pneg %p128
        $region46: #{tpu_custom_call.1} parent=43 // pred_check_branch
          %344 = sbr.rel (%p342) target = $region48
        $region47: #{tpu_custom_call.1} parent=43 // pred_region
          %s345 = sand.u32 %s113, 1
          %s346 = scalar_lea.sflag [#allocation4], %s345
          %s347 = sand.u32 %s113, 1
          %s348 = smul.addr %s347, 8
          %s349 = scalar_lea.vmem [#allocation5], %s348
          %350 = dma.done %s346, 128
        $region48: #{tpu_custom_call.1} parent=43 // pred_fallthru
          _
      $region44: #{tpu_custom_call.1} parent=5 // pred_fallthru
        _
    $region6: #{tpu_custom_call.1} parent=1 // loop_footer
      %s19 = sadd.s32 1, %s15
    $region7: #{tpu_custom_call.1} parent=1 // loop_footer_branch
      %14 = sbr.rel target = $region3
    $region8: #{tpu_custom_call.1} parent=1 // loop_exit
      _
    %351 = vsyncpa [#allocation3], 1
    %s352 = scalar_lea.sflag [#allocation3], 1
    %353 = vsyncpa %s352, 1
    %354 = vsyncpa [#allocation4], 1
    %s355 = scalar_lea.sflag [#allocation4], 1
    %356 = vsyncpa %s355, 1

</llo_original>
